<compile_context>
chip_gen: v5e
topology: v5e:2x2
jax: 0.10.0
libtpu: 0.0.40
codegen_flags: <defaults>
</compile_context>

<pallas_src>
import jax
import jax.numpy as jnp
from jax.experimental import pallas as pl
from jax.experimental.pallas import tpu as pltpu


# ----------------------------------------------------------------------------
# Kernels
# ----------------------------------------------------------------------------
def _fused_linear_relu_kernel(x_ref, w_ref, b_ref, o_ref):
    # Single reduction step: relu(x @ w + b) written straight to the output.
    x = x_ref[...].astype(w_ref.dtype)          # in-kernel f32 -> bf16 cast
    y = jnp.dot(x, w_ref[...], preferred_element_type=jnp.float32)
    o_ref[...] = jnp.maximum(y + b_ref[...], 0.0).astype(o_ref.dtype)


def _accum_linear_relu_kernel(x_ref, w_ref, b_ref, o_ref):
    # Generic multi-step K reduction: accumulate into the resident f32 output
    # block, finalize with bias + ReLU on the last step.
    k = pl.program_id(1)

    @pl.when(k == 0)
    def _():
        o_ref[...] = jnp.zeros_like(o_ref)

    x = x_ref[...].astype(w_ref.dtype)
    o_ref[...] += jnp.dot(x, w_ref[...], preferred_element_type=jnp.float32)

    @pl.when(k == pl.num_programs(1) - 1)
    def _():
        o_ref[...] = jnp.maximum(o_ref[...] + b_ref[...], 0.0)


# ----------------------------------------------------------------------------
# One-time parameter preparation (no per-call weight casts / pads)
# ----------------------------------------------------------------------------
def _vmem_tile_budget_bytes():
    """Generation-aware cap on the kernel's total VMEM working set."""
    cap = 64 * 1024 * 1024            # conservative default (v7x per-TC physical)
    try:
        info = pltpu.get_tpu_info()
        cap = getattr(info, "vmem_capacity_bytes", cap) or cap
    except Exception:
        pass
    # Use at most ~1/3 of physical VMEM, never more than 24 MiB (safe on v7x's
    # 64 MiB while still letting v5e/v6e take large K tiles).
    return min(cap // 3, 24 * 1024 * 1024)


def beginning_init(weight, bias, *, compute_dtype=jnp.bfloat16):
    """weight: (N, K) = fc1.weight (torch layout); bias: (N,).

    Returns a params dict with the weight transposed to (K, N), cast to the
    compute dtype, and K-padded to the chosen reduction tile -- all done once
    so the per-call path performs zero work on W.
    """
    N, K = weight.shape
    w_t = jnp.asarray(weight).T.astype(compute_dtype)        # (K, N), one-time
    b2d = jnp.asarray(bias).reshape(1, N).astype(jnp.float32)

    cbytes = jnp.dtype(compute_dtype).itemsize
    tb_max = 128                                              # worst-case batch tile
    budget = _vmem_tile_budget_bytes()
    # x tile (f32, double-buffered) + W tile (double-buffered), per K element:
    per_tk = 2 * (tb_max * 4 + N * cbytes)
    # resident f32 output block + double-buffered f32 bias:
    fixed = tb_max * N * 4 + 2 * N * 4
    tk_max = max((budget - fixed) // per_tk, 512)

    if K <= tk_max:
        tk, Kp = K, K
    else:
        tk = max((tk_max // 512) * 512, 512)                  # lane/sublane aligned
        Kp = pl.cdiv(K, tk) * tk
        if Kp != K:
            # One-time zero pad: padded rows contribute nothing to the dot.
            w_t = jnp.pad(w_t, ((0, Kp - K), (0, 0)))

    return {"w": w_t, "b": b2d, "K": K, "tk": tk,
            "compute_dtype": compute_dtype}


def _batch_tiling(B):
    """Return (tb, Bp): batch tile and (possibly padded) batch extent."""
    if B <= 8:
        return B, B                      # full-extent block: valid, no padding
    for cand in (256, 128, 64, 32, 16, 8):
        if B % cand == 0:
            return min(cand, 128), B
    # Awkward batch size: pad to a multiple of 8 and tile; padded rows are
    # sliced off after the call.
    Bp = ((B + 7) // 8) * 8
    for cand in (128, 64, 32, 16, 8):
        if Bp % cand == 0:
            return cand, Bp
    return 8, Bp                         # unreachable (Bp is a multiple of 8)


# ----------------------------------------------------------------------------
# Forward
# ----------------------------------------------------------------------------
def beginning_forward(params, x):
    """x: (B, C, H, W) float32.  Returns float32 (B, N) = relu(x.view @ W^T + b)."""
    w_t, b2d = params["w"], params["b"]
    K, tk = params["K"], params["tk"]
    Kp, N = w_t.shape
    cbytes = jnp.dtype(params["compute_dtype"]).itemsize

    B = x.shape[0]
    x2d = x.reshape(B, -1)                       # row-major flatten == torch .view
    assert x2d.shape[1] == K

    if Kp != K:
        # Only the (small) activation needs per-call padding; W was padded once.
        x2d = jnp.pad(x2d, ((0, 0), (0, Kp - K)))

    tb, Bp = _batch_tiling(B)
    if Bp != B:
        x2d = jnp.pad(x2d, ((0, Bp - B), (0, 0)))

    num_k = Kp // tk
    kernel = _fused_linear_relu_kernel if num_k == 1 else _accum_linear_relu_kernel

    # Actual VMEM working set for the chosen tiles (+ headroom).
    need = (2 * tb * tk * 4            # x tile, f32, double-buffered
            + 2 * tk * N * cbytes      # W tile, double-buffered
            + tb * N * 4               # resident f32 output block
            + 2 * N * 4)               # bias, double-buffered
    vmem_limit = int(need) + (4 << 20)

    cost = pl.CostEstimate(
        flops=2 * Bp * Kp * N,
        transcendentals=0,
        bytes_accessed=Bp * Kp * 4 + Kp * N * cbytes + N * 4 + Bp * N * 4,
    )

    out = pl.pallas_call(
        kernel,
        out_shape=jax.ShapeDtypeStruct((Bp, N), jnp.float32),
        grid_spec=pltpu.PrefetchScalarGridSpec(
            num_scalar_prefetch=0,
            grid=(Bp // tb, num_k),
            in_specs=[
                pl.BlockSpec((tb, tk), lambda i, k: (i, k)),   # activations (f32)
                pl.BlockSpec((tk, N), lambda i, k: (k, 0)),    # weights (bf16, streamed)
                pl.BlockSpec((1, N), lambda i, k: (0, 0)),     # bias (resident)
            ],
            out_specs=pl.BlockSpec((tb, N), lambda i, k: (i, 0)),
        ),
        compiler_params=pltpu.CompilerParams(
            dimension_semantics=("parallel", "arbitrary"),
            vmem_limit_bytes=vmem_limit,
        ),
        cost_estimate=cost,
    )(x2d, w_t, b2d)

    return out[:B] if Bp != B else out


# ----------------------------------------------------------------------------
# Self-test
# ----------------------------------------------------------------------------
if __name__ == "__main__":
    # Shapes implied by the module:
    #   x: (batch=2, channels=4, H=16, W=16) -> input_size = 4*16*16 = 1024
    #   hidden_size = 32                      -> output dim = 32*4 = 128
    B, C, H, W = 2, 4, 16, 16
    input_size = C * H * W
    hidden_size = 32
    N = hidden_size * 4

    key = jax.random.PRNGKey(0)
    kx, kw, kb = jax.random.split(key, 3)

    x = jax.random.normal(kx, (B, C, H, W), dtype=jnp.float32)

    # Deterministic init mimicking nn.Linear's U(-1/sqrt(in), 1/sqrt(in)).
    bound = 1.0 / (input_size ** 0.5)
    weight = jax.random.uniform(kw, (N, input_size), jnp.float32, -bound, bound)
    bias = jax.random.uniform(kb, (N,), jnp.float32, -bound, bound)

    # One-time parameter prep (transpose / bf16 cast / pad happen here, not per call).
    params = beginning_init(weight, bias)

    out = jax.block_until_ready(beginning_forward(params, x))

    # Reference at matching precision (bf16 operands, f32 accumulation).
    ref = jnp.maximum(
        jnp.dot(x.reshape(B, -1).astype(jnp.bfloat16),
                weight.T.astype(jnp.bfloat16),
                preferred_element_type=jnp.float32) + bias,
        0.0,
    )
    assert out.shape == (B, N)
    assert out.dtype == jnp.float32
    assert jnp.allclose(out, ref, atol=2e-3, rtol=2e-3)

    print("KERNEL_OK")
</pallas_src>

<mosaic_0001>
module attributes {stable_mosaic.version = 11 : i64} {
  func.func @_fused_linear_relu_kernel(%arg0: i32, %arg1: i32, %arg2: memref<2x1024xf32, #tpu.memory_space<vmem>>, %arg3: memref<1024x128xbf16, #tpu.memory_space<vmem>>, %arg4: memref<1x128xf32, #tpu.memory_space<vmem>>, %arg5: memref<2x128xf32, #tpu.memory_space<vmem>>) attributes {dimension_semantics = [#tpu.dimension_semantics<parallel>, #tpu.dimension_semantics<arbitrary>], iteration_bounds = array<i64: 1, 1>, scalar_prefetch = 0 : i64, scratch_operands = 0 : i64, tpu.core_type = #tpu.core_type<tc>, window_params = [{transform_indices = @transform_0, window_bounds = array<i64: 2, 1024>}, {transform_indices = @transform_1, window_bounds = array<i64: 1024, 128>}, {pipeline_mode = #tpu.pipeline_mode<synchronous>, transform_indices = @transform_2, window_bounds = array<i64: 1, 128>}, {transform_indices = @transform_3, window_bounds = array<i64: 2, 128>}]} {
    %c0 = arith.constant 0 : index
    %c0_0 = arith.constant 0 : index
    %0 = vector.load %arg2[%c0, %c0_0] : memref<2x1024xf32, #tpu.memory_space<vmem>>, vector<2x1024xf32>
    %1 = arith.truncf %0 : vector<2x1024xf32> to vector<2x1024xbf16>
    %c0_1 = arith.constant 0 : index
    %c0_2 = arith.constant 0 : index
    %2 = vector.load %arg3[%c0_1, %c0_2] : memref<1024x128xbf16, #tpu.memory_space<vmem>>, vector<1024x128xbf16>
    %cst = arith.constant dense<0.000000e+00> : vector<2x128xf32>
    %3 = tpu.matmul %1, %2, %cst {dimension_numbers = #tpu.dot_dimension_numbers<[1], [0], [0], [1], [0, 0, 1, 1], [], []>} : vector<2x1024xbf16>, vector<1024x128xbf16>, vector<2x128xf32> -> vector<2x128xf32>
    %c0_3 = arith.constant 0 : index
    %c0_4 = arith.constant 0 : index
    %4 = vector.load %arg4[%c0_3, %c0_4] : memref<1x128xf32, #tpu.memory_space<vmem>>, vector<1x128xf32>
    %5 = vector.broadcast %4 : vector<1x128xf32> to vector<2x128xf32>
    %6 = arith.addf %3, %5 : vector<2x128xf32>
    %cst_5 = arith.constant 0.000000e+00 : f32
    %7 = vector.broadcast %cst_5 : f32 to vector<2x128xf32>
    %8 = arith.maximumf %6, %7 : vector<2x128xf32>
    %c0_6 = arith.constant 0 : index
    %c0_7 = arith.constant 0 : index
    %9 = vector.load %arg5[%c0_6, %c0_7] : memref<2x128xf32, #tpu.memory_space<vmem>>, vector<2x128xf32>
    tpu.vector_store %arg5[%c0_6, %c0_7], %8 {strides = array<i32>} : memref<2x128xf32, #tpu.memory_space<vmem>>, vector<2x128xf32>,
    return
  }
  func.func @transform_0(%arg0: i32, %arg1: i32) -> (i32, i32) {
    %c0_i32 = arith.constant 0 : i32
    return %arg0, %arg1 : i32, i32
  }
  func.func @transform_1(%arg0: i32, %arg1: i32) -> (i32, i32) {
    %c0_i32 = arith.constant 0 : i32
    %c0_i32_0 = arith.constant 0 : i32
    return %arg1, %c0_i32 : i32, i32
  }
  func.func @transform_2(%arg0: i32, %arg1: i32) -> (i32, i32) {
    %c0_i32 = arith.constant 0 : i32
    %c0_i32_0 = arith.constant 0 : i32
    %c0_i32_1 = arith.constant 0 : i32
    return %c0_i32, %c0_i32_0 : i32, i32
  }
  func.func @transform_3(%arg0: i32, %arg1: i32) -> (i32, i32) {
    %c0_i32 = arith.constant 0 : i32
    %c0_i32_0 = arith.constant 0 : i32
    return %arg0, %c0_i32 : i32, i32
  }
}

</mosaic_0001>

<llo_original>
// kernel: tpu_custom_call.1
$region0: #{tpu_custom_call.1}
  #allocation0 [shape = 'u32[]', space=smem, size = 0x4, offset = 0x4, fixed_abs, tag = 'smem constant byte address 0x4 - core index']
  #allocation1 [shape = 'u32[72,128]{1,0:T(1,128)}', space=vmem, size = 0x9000, scoped, tag = 'internal scratch']
  %s0 = inlined_call_operand.hbm [shape: f32[2,1024], index: 0, kind: input, shape index: {}]
  %s1 = inlined_call_operand.hbm [shape: bf16[1024,128], index: 1, kind: input, shape index: {}]
  %s2 = inlined_call_operand.vmem [shape: f32[1,128], index: 2, kind: input, shape index: {}]
  %s3 = inlined_call_operand.hbm [shape: f32[2,128], index: 3, kind: output, shape index: {}]
  %s4 = sld [smem:[#allocation0]]
  $region30: #{tpu_custom_call.1} parent=0
    _
  %s6 = ssub.s32 1, %s4
  %s7 = scalar_select 0, %s6, %s4
  $region1: #{tpu_custom_call.1} parent=0
    #allocation2 [shape = 'u8[8192]{0}', space=vmem, size = 0x2000, scoped, tag = 'input window, operand 0, single buffered']
    #allocation3 [shape = 's32[1]{0}', space=sflag, size = 0x4, scoped, tag = 'scoped memory for tpu_custom_call.1']
    #allocation4 [shape = 's32[1]{0}', space=sflag, size = 0x4, scoped, tag = 'scoped memory for tpu_custom_call.1']
    #allocation5 [shape = 'u8[262144]{0}', space=vmem, size = 0x40000, scoped, tag = 'input window, operand 1, single buffered']
    #allocation6 [shape = 's32[1]{0}', space=sflag, size = 0x4, scoped, tag = 'scoped memory for tpu_custom_call.1']
    #allocation7 [shape = 'u8[1024]{0}', space=vmem, size = 0x400, scoped, tag = 'output window, operand 0, single buffered']
    %8 = vsyncpa [#allocation3], 0
    %9 = vsyncpa [#allocation6], 0
    %10 = vsyncpa [#allocation4], 0
    // Predicated region
    $region2: #{tpu_custom_call.1} parent=1 // pred_check
      _
    $region3: #{tpu_custom_call.1} parent=1 // pred_check_branch
      %12 = sbr.rel (0) target = $region5
    $region4: #{tpu_custom_call.1} parent=1 // pred_region
      %14 = vsyncadd [#allocation3], 0
      %s16 = sshll.u32 %s0, 4
      %s17 = int_to_ptr.hbm [resolvable:$true] %s16
      %s18 = sshll.u32 [#allocation2], 4
      %s19 = int_to_ptr.vmem [resolvable:$true] %s18
      %21 = dma.hbm_to_vmem [thread:$0]  %s17, 256, %s19, [#allocation3]
    $region5: #{tpu_custom_call.1} parent=1 // pred_fallthru
      _
    // Predicated region
    $region6: #{tpu_custom_call.1} parent=1 // pred_check
      _
    $region7: #{tpu_custom_call.1} parent=1 // pred_check_branch
      %23 = sbr.rel (0) target = $region9
    $region8: #{tpu_custom_call.1} parent=1 // pred_region
      %25 = vsyncadd [#allocation6], 0
      %s26 = sshll.u32 %s1, 4
      %s27 = int_to_ptr.hbm [resolvable:$true] %s26
      %s28 = sshll.u32 [#allocation5], 4
      %s29 = int_to_ptr.vmem [resolvable:$true] %s28
      %34 = dma.hbm_to_vmem [thread:$0]  %s27, 8192, %s29, [#allocation6], 64, 64, 4
    $region9: #{tpu_custom_call.1} parent=1 // pred_fallthru
      _
    // Predicated region
    $region10: #{tpu_custom_call.1} parent=1 // pred_check
      _
    $region11: #{tpu_custom_call.1} parent=1 // pred_check_branch
      %36 = sbr.rel (0) target = $region13
    $region12: #{tpu_custom_call.1} parent=1 // pred_region
      _
    $region13: #{tpu_custom_call.1} parent=1 // pred_fallthru
      _
    // Predicated region
    $region14: #{tpu_custom_call.1} parent=1 // pred_check
      _
    $region15: #{tpu_custom_call.1} parent=1 // pred_check_branch
      %38 = sbr.rel (0) target = $region17
    $region16: #{tpu_custom_call.1} parent=1 // pred_region
      %40 = dma.done [#allocation3], 256
    $region17: #{tpu_custom_call.1} parent=1 // pred_fallthru
      _
    // Predicated region
    $region18: #{tpu_custom_call.1} parent=1 // pred_check
      _
    $region19: #{tpu_custom_call.1} parent=1 // pred_check_branch
      %42 = sbr.rel (0) target = $region21
    $region20: #{tpu_custom_call.1} parent=1 // pred_region
      %44 = dma.done [#allocation6], 8192
    $region21: #{tpu_custom_call.1} parent=1 // pred_fallthru
      _
    %v45 = vld [vmem:[#allocation2] sm:$0xff]
    %v46 = vld [vmem:[#allocation2 + $0x8] sm:$0xff]
    %49 = vst [vmem:[#allocation1] ss:$4 sm:$0xff] %v45
    %s50 = scalar_lea.vmem [#allocation1], 32
    %51 = vst [vmem:[%s50] ss:$4 sm:$0xff] %v46
    %v52 = vld.sshfl [vmem:[#allocation1] sm:$0xff pattern:$0x73625140]
    %v53 = vld.sshfl [vmem:[#allocation1 + $0x8] sm:$0xff pattern:$0x73625140]
    %v54 = vld.sshfl [vmem:[#allocation1 + $0x10] sm:$0xff pattern:$0x73625140]
    %v55 = vld.sshfl [vmem:[#allocation1 + $0x18] sm:$0xff pattern:$0x73625140]
    %v56 = vld.sshfl [vmem:[#allocation1 + $0x20] sm:$0xff pattern:$0x73625140]
    %v57 = vld.sshfl [vmem:[#allocation1 + $0x28] sm:$0xff pattern:$0x73625140]
    %v58 = vld.sshfl [vmem:[#allocation1 + $0x30] sm:$0xff pattern:$0x73625140]
    %v59 = vld.sshfl [vmem:[#allocation1 + $0x38] sm:$0xff pattern:$0x73625140]
    %v68 = vpack.c.bf16 %v52, %v52
    %v69 = vpack.c.bf16 %v53, %v53
    %v70 = vpack.c.bf16 %v54, %v54
    %v71 = vpack.c.bf16 %v55, %v55
    %v72 = vpack.c.bf16 %v56, %v56
    %v73 = vpack.c.bf16 %v57, %v57
    %v74 = vpack.c.bf16 %v58, %v58
    %v75 = vpack.c.bf16 %v59, %v59
    %v76 = vld [vmem:[#allocation5] sm:$0xf]
    %v77 = vld [vmem:[#allocation5 + $0x4] sm:$0xf]
    %v78 = vld [vmem:[#allocation5 + $0x8] sm:$0xf]
    %v79 = vld [vmem:[#allocation5 + $0xc] sm:$0xf]
    %v80 = vld [vmem:[#allocation5 + $0x10] sm:$0xf]
    %v81 = vld [vmem:[#allocation5 + $0x14] sm:$0xf]
    %v82 = vld [vmem:[#allocation5 + $0x18] sm:$0xf]
    %v83 = vld [vmem:[#allocation5 + $0x1c] sm:$0xf]
    %v84 = vld [vmem:[#allocation5 + $0x20] sm:$0xf]
    %v85 = vld [vmem:[#allocation5 + $0x24] sm:$0xf]
    %v86 = vld [vmem:[#allocation5 + $0x28] sm:$0xf]
    %v87 = vld [vmem:[#allocation5 + $0x2c] sm:$0xf]
    %v88 = vld [vmem:[#allocation5 + $0x30] sm:$0xf]
    %v89 = vld [vmem:[#allocation5 + $0x34] sm:$0xf]
    %v90 = vld [vmem:[#allocation5 + $0x38] sm:$0xf]
    %v91 = vld [vmem:[#allocation5 + $0x3c] sm:$0xf]
    %v92 = vld [vmem:[#allocation5 + $0x40] sm:$0xf]
    %v93 = vld [vmem:[#allocation5 + $0x44] sm:$0xf]
    %v94 = vld [vmem:[#allocation5 + $0x48] sm:$0xf]
    %v95 = vld [vmem:[#allocation5 + $0x4c] sm:$0xf]
    %v96 = vld [vmem:[#allocation5 + $0x50] sm:$0xf]
    %v97 = vld [vmem:[#allocation5 + $0x54] sm:$0xf]
    %v98 = vld [vmem:[#allocation5 + $0x58] sm:$0xf]
    %v99 = vld [vmem:[#allocation5 + $0x5c] sm:$0xf]
    %v100 = vld [vmem:[#allocation5 + $0x60] sm:$0xf]
    %v101 = vld [vmem:[#allocation5 + $0x64] sm:$0xf]
    %v102 = vld [vmem:[#allocation5 + $0x68] sm:$0xf]
    %v103 = vld [vmem:[#allocation5 + $0x6c] sm:$0xf]
    %v104 = vld [vmem:[#allocation5 + $0x70] sm:$0xf]
    %v105 = vld [vmem:[#allocation5 + $0x74] sm:$0xf]
    %v106 = vld [vmem:[#allocation5 + $0x78] sm:$0xf]
    %v107 = vld [vmem:[#allocation5 + $0x7c] sm:$0xf]
    %v108 = vld [vmem:[#allocation5 + $0x80] sm:$0xf]
    %v109 = vld [vmem:[#allocation5 + $0x84] sm:$0xf]
    %v110 = vld [vmem:[#allocation5 + $0x88] sm:$0xf]
    %v111 = vld [vmem:[#allocation5 + $0x8c] sm:$0xf]
    %v112 = vld [vmem:[#allocation5 + $0x90] sm:$0xf]
    %v113 = vld [vmem:[#allocation5 + $0x94] sm:$0xf]
    %v114 = vld [vmem:[#allocation5 + $0x98] sm:$0xf]
    %v115 = vld [vmem:[#allocation5 + $0x9c] sm:$0xf]
    %v116 = vld [vmem:[#allocation5 + $0xa0] sm:$0xf]
    %v117 = vld [vmem:[#allocation5 + $0xa4] sm:$0xf]
    %v118 = vld [vmem:[#allocation5 + $0xa8] sm:$0xf]
    %v119 = vld [vmem:[#allocation5 + $0xac] sm:$0xf]
    %v120 = vld [vmem:[#allocation5 + $0xb0] sm:$0xf]
    %v121 = vld [vmem:[#allocation5 + $0xb4] sm:$0xf]
    %v122 = vld [vmem:[#allocation5 + $0xb8] sm:$0xf]
    %v123 = vld [vmem:[#allocation5 + $0xbc] sm:$0xf]
    %v124 = vld [vmem:[#allocation5 + $0xc0] sm:$0xf]
    %v125 = vld [vmem:[#allocation5 + $0xc4] sm:$0xf]
    %v126 = vld [vmem:[#allocation5 + $0xc8] sm:$0xf]
    %v127 = vld [vmem:[#allocation5 + $0xcc] sm:$0xf]
    %v128 = vld [vmem:[#allocation5 + $0xd0] sm:$0xf]
    %v129 = vld [vmem:[#allocation5 + $0xd4] sm:$0xf]
    %v130 = vld [vmem:[#allocation5 + $0xd8] sm:$0xf]
    %v131 = vld [vmem:[#allocation5 + $0xdc] sm:$0xf]
    %v132 = vld [vmem:[#allocation5 + $0xe0] sm:$0xf]
    %v133 = vld [vmem:[#allocation5 + $0xe4] sm:$0xf]
    %v134 = vld [vmem:[#allocation5 + $0xe8] sm:$0xf]
    %v135 = vld [vmem:[#allocation5 + $0xec] sm:$0xf]
    %v136 = vld [vmem:[#allocation5 + $0xf0] sm:$0xf]
    %v137 = vld [vmem:[#allocation5 + $0xf4] sm:$0xf]
    %v138 = vld [vmem:[#allocation5 + $0xf8] sm:$0xf]
    %v139 = vld [vmem:[#allocation5 + $0xfc] sm:$0xf]
    %v140 = vld [vmem:[#allocation5 + $0x100] sm:$0xf]
    %v141 = vld [vmem:[#allocation5 + $0x104] sm:$0xf]
    %v142 = vld [vmem:[#allocation5 + $0x108] sm:$0xf]
    %v143 = vld [vmem:[#allocation5 + $0x10c] sm:$0xf]
    %v144 = vld [vmem:[#allocation5 + $0x110] sm:$0xf]
    %v145 = vld [vmem:[#allocation5 + $0x114] sm:$0xf]
    %v146 = vld [vmem:[#allocation5 + $0x118] sm:$0xf]
    %v147 = vld [vmem:[#allocation5 + $0x11c] sm:$0xf]
    %v148 = vld [vmem:[#allocation5 + $0x120] sm:$0xf]
    %v149 = vld [vmem:[#allocation5 + $0x124] sm:$0xf]
    %v150 = vld [vmem:[#allocation5 + $0x128] sm:$0xf]
    %v151 = vld [vmem:[#allocation5 + $0x12c] sm:$0xf]
    %v152 = vld [vmem:[#allocation5 + $0x130] sm:$0xf]
    %v153 = vld [vmem:[#allocation5 + $0x134] sm:$0xf]
    %v154 = vld [vmem:[#allocation5 + $0x138] sm:$0xf]
    %v155 = vld [vmem:[#allocation5 + $0x13c] sm:$0xf]
    %v156 = vld [vmem:[#allocation5 + $0x140] sm:$0xf]
    %v157 = vld [vmem:[#allocation5 + $0x144] sm:$0xf]
    %v158 = vld [vmem:[#allocation5 + $0x148] sm:$0xf]
    %v159 = vld [vmem:[#allocation5 + $0x14c] sm:$0xf]
    %v160 = vld [vmem:[#allocation5 + $0x150] sm:$0xf]
    %v161 = vld [vmem:[#allocation5 + $0x154] sm:$0xf]
    %v162 = vld [vmem:[#allocation5 + $0x158] sm:$0xf]
    %v163 = vld [vmem:[#allocation5 + $0x15c] sm:$0xf]
    %v164 = vld [vmem:[#allocation5 + $0x160] sm:$0xf]
    %v165 = vld [vmem:[#allocation5 + $0x164] sm:$0xf]
    %v166 = vld [vmem:[#allocation5 + $0x168] sm:$0xf]
    %v167 = vld [vmem:[#allocation5 + $0x16c] sm:$0xf]
    %v168 = vld [vmem:[#allocation5 + $0x170] sm:$0xf]
    %v169 = vld [vmem:[#allocation5 + $0x174] sm:$0xf]
    %v170 = vld [vmem:[#allocation5 + $0x178] sm:$0xf]
    %v171 = vld [vmem:[#allocation5 + $0x17c] sm:$0xf]
    %v172 = vld [vmem:[#allocation5 + $0x180] sm:$0xf]
    %v173 = vld [vmem:[#allocation5 + $0x184] sm:$0xf]
    %v174 = vld [vmem:[#allocation5 + $0x188] sm:$0xf]
    %v175 = vld [vmem:[#allocation5 + $0x18c] sm:$0xf]
    %v176 = vld [vmem:[#allocation5 + $0x190] sm:$0xf]
    %v177 = vld [vmem:[#allocation5 + $0x194] sm:$0xf]
    %v178 = vld [vmem:[#allocation5 + $0x198] sm:$0xf]
    %v179 = vld [vmem:[#allocation5 + $0x19c] sm:$0xf]
    %v180 = vld [vmem:[#allocation5 + $0x1a0] sm:$0xf]
    %v181 = vld [vmem:[#allocation5 + $0x1a4] sm:$0xf]
    %v182 = vld [vmem:[#allocation5 + $0x1a8] sm:$0xf]
    %v183 = vld [vmem:[#allocation5 + $0x1ac] sm:$0xf]
    %v184 = vld [vmem:[#allocation5 + $0x1b0] sm:$0xf]
    %v185 = vld [vmem:[#allocation5 + $0x1b4] sm:$0xf]
    %v186 = vld [vmem:[#allocation5 + $0x1b8] sm:$0xf]
    %v187 = vld [vmem:[#allocation5 + $0x1bc] sm:$0xf]
    %v188 = vld [vmem:[#allocation5 + $0x1c0] sm:$0xf]
    %v189 = vld [vmem:[#allocation5 + $0x1c4] sm:$0xf]
    %v190 = vld [vmem:[#allocation5 + $0x1c8] sm:$0xf]
    %v191 = vld [vmem:[#allocation5 + $0x1cc] sm:$0xf]
    %v192 = vld [vmem:[#allocation5 + $0x1d0] sm:$0xf]
    %v193 = vld [vmem:[#allocation5 + $0x1d4] sm:$0xf]
    %v194 = vld [vmem:[#allocation5 + $0x1d8] sm:$0xf]
    %v195 = vld [vmem:[#allocation5 + $0x1dc] sm:$0xf]
    %v196 = vld [vmem:[#allocation5 + $0x1e0] sm:$0xf]
    %v197 = vld [vmem:[#allocation5 + $0x1e4] sm:$0xf]
    %v198 = vld [vmem:[#allocation5 + $0x1e8] sm:$0xf]
    %v199 = vld [vmem:[#allocation5 + $0x1ec] sm:$0xf]
    %v200 = vld [vmem:[#allocation5 + $0x1f0] sm:$0xf]
    %v201 = vld [vmem:[#allocation5 + $0x1f4] sm:$0xf]
    %v202 = vld [vmem:[#allocation5 + $0x1f8] sm:$0xf]
    %v203 = vld [vmem:[#allocation5 + $0x1fc] sm:$0xf]
    %v204 = vld [vmem:[%s2] sm:$0x1]
    %v206 = vperm.slane %v204, 0
    %v336 = vunpack.c.l.b16 %v76
    %v337 = vunpack.c.l.b16 %v77
    %v338 = vunpack.c.l.b16 %v78
    %v339 = vunpack.c.l.b16 %v79
    %v340 = vunpack.c.l.b16 %v80
    %v341 = vunpack.c.l.b16 %v81
    %v342 = vunpack.c.l.b16 %v82
    %v343 = vunpack.c.l.b16 %v83
    %v344 = vunpack.c.l.b16 %v84
    %v345 = vunpack.c.l.b16 %v85
    %v346 = vunpack.c.l.b16 %v86
    %v347 = vunpack.c.l.b16 %v87
    %v348 = vunpack.c.l.b16 %v88
    %v349 = vunpack.c.l.b16 %v89
    %v350 = vunpack.c.l.b16 %v90
    %v351 = vunpack.c.l.b16 %v91
    %v352 = vunpack.c.l.b16 %v92
    %v353 = vunpack.c.l.b16 %v93
    %v354 = vunpack.c.l.b16 %v94
    %v355 = vunpack.c.l.b16 %v95
    %v356 = vunpack.c.l.b16 %v96
    %v357 = vunpack.c.l.b16 %v97
    %v358 = vunpack.c.l.b16 %v98
    %v359 = vunpack.c.l.b16 %v99
    %v360 = vunpack.c.l.b16 %v100
    %v361 = vunpack.c.l.b16 %v101
    %v362 = vunpack.c.l.b16 %v102
    %v363 = vunpack.c.l.b16 %v103
    %v364 = vunpack.c.l.b16 %v104
    %v365 = vunpack.c.l.b16 %v105
    %v366 = vunpack.c.l.b16 %v106
    %v367 = vunpack.c.l.b16 %v107
    %v368 = vunpack.c.l.b16 %v108
    %v369 = vunpack.c.l.b16 %v109
    %v370 = vunpack.c.l.b16 %v110
    %v371 = vunpack.c.l.b16 %v111
    %v372 = vunpack.c.l.b16 %v112
    %v373 = vunpack.c.l.b16 %v113
    %v374 = vunpack.c.l.b16 %v114
    %v375 = vunpack.c.l.b16 %v115
    %v376 = vunpack.c.l.b16 %v116
    %v377 = vunpack.c.l.b16 %v117
    %v378 = vunpack.c.l.b16 %v118
    %v379 = vunpack.c.l.b16 %v119
    %v380 = vunpack.c.l.b16 %v120
    %v381 = vunpack.c.l.b16 %v121
    %v382 = vunpack.c.l.b16 %v122
    %v383 = vunpack.c.l.b16 %v123
    %v384 = vunpack.c.l.b16 %v124
    %v385 = vunpack.c.l.b16 %v125
    %v386 = vunpack.c.l.b16 %v126
    %v387 = vunpack.c.l.b16 %v127
    %v388 = vunpack.c.l.b16 %v128
    %v389 = vunpack.c.l.b16 %v129
    %v390 = vunpack.c.l.b16 %v130
    %v391 = vunpack.c.l.b16 %v131
    %v392 = vunpack.c.l.b16 %v132
    %v393 = vunpack.c.l.b16 %v133
    %v394 = vunpack.c.l.b16 %v134
    %v395 = vunpack.c.l.b16 %v135
    %v396 = vunpack.c.l.b16 %v136
    %v397 = vunpack.c.l.b16 %v137
    %v398 = vunpack.c.l.b16 %v138
    %v399 = vunpack.c.l.b16 %v139
    %v400 = vunpack.c.l.b16 %v140
    %v401 = vunpack.c.l.b16 %v141
    %v402 = vunpack.c.l.b16 %v142
    %v403 = vunpack.c.l.b16 %v143
    %v404 = vunpack.c.l.b16 %v144
    %v405 = vunpack.c.l.b16 %v145
    %v406 = vunpack.c.l.b16 %v146
    %v407 = vunpack.c.l.b16 %v147
    %v408 = vunpack.c.l.b16 %v148
    %v409 = vunpack.c.l.b16 %v149
    %v410 = vunpack.c.l.b16 %v150
    %v411 = vunpack.c.l.b16 %v151
    %v412 = vunpack.c.l.b16 %v152
    %v413 = vunpack.c.l.b16 %v153
    %v414 = vunpack.c.l.b16 %v154
    %v415 = vunpack.c.l.b16 %v155
    %v416 = vunpack.c.l.b16 %v156
    %v417 = vunpack.c.l.b16 %v157
    %v418 = vunpack.c.l.b16 %v158
    %v419 = vunpack.c.l.b16 %v159
    %v420 = vunpack.c.l.b16 %v160
    %v421 = vunpack.c.l.b16 %v161
    %v422 = vunpack.c.l.b16 %v162
    %v423 = vunpack.c.l.b16 %v163
    %v424 = vunpack.c.l.b16 %v164
    %v425 = vunpack.c.l.b16 %v165
    %v426 = vunpack.c.l.b16 %v166
    %v427 = vunpack.c.l.b16 %v167
    %v428 = vunpack.c.l.b16 %v168
    %v429 = vunpack.c.l.b16 %v169
    %v430 = vunpack.c.l.b16 %v170
    %v431 = vunpack.c.l.b16 %v171
    %v432 = vunpack.c.l.b16 %v172
    %v433 = vunpack.c.l.b16 %v173
    %v434 = vunpack.c.l.b16 %v174
    %v435 = vunpack.c.l.b16 %v175
    %v436 = vunpack.c.l.b16 %v176
    %v437 = vunpack.c.l.b16 %v177
    %v438 = vunpack.c.l.b16 %v178
    %v439 = vunpack.c.l.b16 %v179
    %v440 = vunpack.c.l.b16 %v180
    %v441 = vunpack.c.l.b16 %v181
    %v442 = vunpack.c.l.b16 %v182
    %v443 = vunpack.c.l.b16 %v183
    %v444 = vunpack.c.l.b16 %v184
    %v445 = vunpack.c.l.b16 %v185
    %v446 = vunpack.c.l.b16 %v186
    %v447 = vunpack.c.l.b16 %v187
    %v448 = vunpack.c.l.b16 %v188
    %v449 = vunpack.c.l.b16 %v189
    %v450 = vunpack.c.l.b16 %v190
    %v451 = vunpack.c.l.b16 %v191
    %v452 = vunpack.c.l.b16 %v192
    %v453 = vunpack.c.l.b16 %v193
    %v454 = vunpack.c.l.b16 %v194
    %v455 = vunpack.c.l.b16 %v195
    %v456 = vunpack.c.l.b16 %v196
    %v457 = vunpack.c.l.b16 %v197
    %v458 = vunpack.c.l.b16 %v198
    %v459 = vunpack.c.l.b16 %v199
    %v460 = vunpack.c.l.b16 %v200
    %v461 = vunpack.c.l.b16 %v201
    %v462 = vunpack.c.l.b16 %v202
    %v463 = vunpack.c.l.b16 %v203
    %v464 = vpack.c.b16 %v337, %v336
    %v465 = vpack.c.b16 %v339, %v338
    %v466 = vpack.c.b16 %v341, %v340
    %v467 = vpack.c.b16 %v343, %v342
    %v468 = vpack.c.b16 %v345, %v344
    %v469 = vpack.c.b16 %v347, %v346
    %v470 = vpack.c.b16 %v349, %v348
    %v471 = vpack.c.b16 %v351, %v350
    %v472 = vpack.c.b16 %v353, %v352
    %v473 = vpack.c.b16 %v355, %v354
    %v474 = vpack.c.b16 %v357, %v356
    %v475 = vpack.c.b16 %v359, %v358
    %v476 = vpack.c.b16 %v361, %v360
    %v477 = vpack.c.b16 %v363, %v362
    %v478 = vpack.c.b16 %v365, %v364
    %v479 = vpack.c.b16 %v367, %v366
    %v480 = vpack.c.b16 %v369, %v368
    %v481 = vpack.c.b16 %v371, %v370
    %v482 = vpack.c.b16 %v373, %v372
    %v483 = vpack.c.b16 %v375, %v374
    %v484 = vpack.c.b16 %v377, %v376
    %v485 = vpack.c.b16 %v379, %v378
    %v486 = vpack.c.b16 %v381, %v380
    %v487 = vpack.c.b16 %v383, %v382
    %v488 = vpack.c.b16 %v385, %v384
    %v489 = vpack.c.b16 %v387, %v386
    %v490 = vpack.c.b16 %v389, %v388
    %v491 = vpack.c.b16 %v391, %v390
    %v492 = vpack.c.b16 %v393, %v392
    %v493 = vpack.c.b16 %v395, %v394
    %v494 = vpack.c.b16 %v397, %v396
    %v495 = vpack.c.b16 %v399, %v398
    %v496 = vpack.c.b16 %v401, %v400
    %v497 = vpack.c.b16 %v403, %v402
    %v498 = vpack.c.b16 %v405, %v404
    %v499 = vpack.c.b16 %v407, %v406
    %v500 = vpack.c.b16 %v409, %v408
    %v501 = vpack.c.b16 %v411, %v410
    %v502 = vpack.c.b16 %v413, %v412
    %v503 = vpack.c.b16 %v415, %v414
    %v504 = vpack.c.b16 %v417, %v416
    %v505 = vpack.c.b16 %v419, %v418
    %v506 = vpack.c.b16 %v421, %v420
    %v507 = vpack.c.b16 %v423, %v422
    %v508 = vpack.c.b16 %v425, %v424
    %v509 = vpack.c.b16 %v427, %v426
    %v510 = vpack.c.b16 %v429, %v428
    %v511 = vpack.c.b16 %v431, %v430
    %v512 = vpack.c.b16 %v433, %v432
    %v513 = vpack.c.b16 %v435, %v434
    %v514 = vpack.c.b16 %v437, %v436
    %v515 = vpack.c.b16 %v439, %v438
    %v516 = vpack.c.b16 %v441, %v440
    %v517 = vpack.c.b16 %v443, %v442
    %v518 = vpack.c.b16 %v445, %v444
    %v519 = vpack.c.b16 %v447, %v446
    %v520 = vpack.c.b16 %v449, %v448
    %v521 = vpack.c.b16 %v451, %v450
    %v522 = vpack.c.b16 %v453, %v452
    %v523 = vpack.c.b16 %v455, %v454
    %v524 = vpack.c.b16 %v457, %v456
    %v525 = vpack.c.b16 %v459, %v458
    %v526 = vpack.c.b16 %v461, %v460
    %v527 = vpack.c.b16 %v463, %v462
    %592 = vmatpush.bf16.msra.mxu0 %v471
    %593 = vmatpush.bf16.msra.mxu0 %v470
    %594 = vmatpush.bf16.msra.mxu0 %v469
    %595 = vmatpush.bf16.msra.mxu0 %v468
    %596 = vmatpush.bf16.msra.mxu0 %v467
    %597 = vmatpush.bf16.msra.mxu0 %v466
    %598 = vmatpush.bf16.msra.mxu0 %v465
    %599 = vmatpush.bf16.msra.mxu0 %v464
    %600 = vmatmul.bf16.gmra.mxu0 %v68
    %v601 = vpop.f32.mrf.mxu0
    %v602 = vadd.f32 %v206, %v601
    %v603 = vpop.f32.mrf.mxu0
    %604 = vdwg.mxu0
    %605 = vmatpush.bf16.msra.mxu0 %v479
    %606 = vmatpush.bf16.msra.mxu0 %v478
    %607 = vmatpush.bf16.msra.mxu0 %v477
    %608 = vmatpush.bf16.msra.mxu0 %v476
    %609 = vmatpush.bf16.msra.mxu0 %v475
    %610 = vmatpush.bf16.msra.mxu0 %v474
    %611 = vmatpush.bf16.msra.mxu0 %v473
    %612 = vmatpush.bf16.msra.mxu0 %v472
    %613 = vmatmul.bf16.gmra.mxu0 %v69
    %v614 = vpop.f32.mrf.mxu0
    %v615 = vadd.f32 %v602, %v614
    %v616 = vpop.f32.mrf.mxu0
    %617 = vdwg.mxu0
    %618 = vmatpush.bf16.msra.mxu0 %v487
    %619 = vmatpush.bf16.msra.mxu0 %v486
    %620 = vmatpush.bf16.msra.mxu0 %v485
    %621 = vmatpush.bf16.msra.mxu0 %v484
    %622 = vmatpush.bf16.msra.mxu0 %v483
    %623 = vmatpush.bf16.msra.mxu0 %v482
    %624 = vmatpush.bf16.msra.mxu0 %v481
    %625 = vmatpush.bf16.msra.mxu0 %v480
    %626 = vmatmul.bf16.gmra.mxu0 %v70
    %v627 = vpop.f32.mrf.mxu0
    %v628 = vadd.f32 %v615, %v627
    %v629 = vpop.f32.mrf.mxu0
    %630 = vdwg.mxu0
    %631 = vmatpush.bf16.msra.mxu0 %v495
    %632 = vmatpush.bf16.msra.mxu0 %v494
    %633 = vmatpush.bf16.msra.mxu0 %v493
    %634 = vmatpush.bf16.msra.mxu0 %v492
    %635 = vmatpush.bf16.msra.mxu0 %v491
    %636 = vmatpush.bf16.msra.mxu0 %v490
    %637 = vmatpush.bf16.msra.mxu0 %v489
    %638 = vmatpush.bf16.msra.mxu0 %v488
    %639 = vmatmul.bf16.gmra.mxu0 %v71
    %v640 = vpop.f32.mrf.mxu0
    %v641 = vadd.f32 %v628, %v640
    %v642 = vpop.f32.mrf.mxu0
    %643 = vdwg.mxu0
    %644 = vmatpush.bf16.msra.mxu0 %v503
    %645 = vmatpush.bf16.msra.mxu0 %v502
    %646 = vmatpush.bf16.msra.mxu0 %v501
    %647 = vmatpush.bf16.msra.mxu0 %v500
    %648 = vmatpush.bf16.msra.mxu0 %v499
    %649 = vmatpush.bf16.msra.mxu0 %v498
    %650 = vmatpush.bf16.msra.mxu0 %v497
    %651 = vmatpush.bf16.msra.mxu0 %v496
    %652 = vmatmul.bf16.gmra.mxu0 %v72
    %v653 = vpop.f32.mrf.mxu0
    %v654 = vadd.f32 %v641, %v653
    %v655 = vpop.f32.mrf.mxu0
    %656 = vdwg.mxu0
    %657 = vmatpush.bf16.msra.mxu0 %v511
    %658 = vmatpush.bf16.msra.mxu0 %v510
    %659 = vmatpush.bf16.msra.mxu0 %v509
    %660 = vmatpush.bf16.msra.mxu0 %v508
    %661 = vmatpush.bf16.msra.mxu0 %v507
    %662 = vmatpush.bf16.msra.mxu0 %v506
    %663 = vmatpush.bf16.msra.mxu0 %v505
    %664 = vmatpush.bf16.msra.mxu0 %v504
    %665 = vmatmul.bf16.gmra.mxu0 %v73
    %v666 = vpop.f32.mrf.mxu0
    %v667 = vadd.f32 %v654, %v666
    %v668 = vpop.f32.mrf.mxu0
    %669 = vdwg.mxu0
    %670 = vmatpush.bf16.msra.mxu0 %v519
    %671 = vmatpush.bf16.msra.mxu0 %v518
    %672 = vmatpush.bf16.msra.mxu0 %v517
    %673 = vmatpush.bf16.msra.mxu0 %v516
    %674 = vmatpush.bf16.msra.mxu0 %v515
    %675 = vmatpush.bf16.msra.mxu0 %v514
    %676 = vmatpush.bf16.msra.mxu0 %v513
    %677 = vmatpush.bf16.msra.mxu0 %v512
    %678 = vmatmul.bf16.gmra.mxu0 %v74
    %v679 = vpop.f32.mrf.mxu0
    %v680 = vadd.f32 %v667, %v679
    %v681 = vpop.f32.mrf.mxu0
    %682 = vdwg.mxu0
    %683 = vmatpush.bf16.msra.mxu0 %v527
    %684 = vmatpush.bf16.msra.mxu0 %v526
    %685 = vmatpush.bf16.msra.mxu0 %v525
    %686 = vmatpush.bf16.msra.mxu0 %v524
    %687 = vmatpush.bf16.msra.mxu0 %v523
    %688 = vmatpush.bf16.msra.mxu0 %v522
    %689 = vmatpush.bf16.msra.mxu0 %v521
    %690 = vmatpush.bf16.msra.mxu0 %v520
    %691 = vmatmul.bf16.gmra.mxu0 %v75
    %v692 = vpop.f32.mrf.mxu0
    %v693 = vadd.f32 %v680, %v692
    %v694 = vpop.f32.mrf.mxu0
    %695 = vdwg.mxu0
    %v696 = vmax.f32 %v693, 0.0
    %697 = vst [vmem:[#allocation7] sm:$0x3] %v696
    // Predicated region
    $region22: #{tpu_custom_call.1} parent=1 // pred_check
      _
    $region23: #{tpu_custom_call.1} parent=1 // pred_check_branch
      %699 = sbr.rel (0) target = $region25
    $region24: #{tpu_custom_call.1} parent=1 // pred_region
      %701 = vsyncadd [#allocation4], 0
      %s703 = sshll.u32 [#allocation7], 4
      %s704 = int_to_ptr.vmem [resolvable:$true] %s703
      %s705 = sshll.u32 %s3, 4
      %s706 = int_to_ptr.hbm [resolvable:$true] %s705
      %708 = dma.vmem_to_hbm [thread:$0]  %s704, 32, %s706, [#allocation4]
    $region25: #{tpu_custom_call.1} parent=1 // pred_fallthru
      _
    // Predicated region
    $region26: #{tpu_custom_call.1} parent=1 // pred_check
      _
    $region27: #{tpu_custom_call.1} parent=1 // pred_check_branch
      %710 = sbr.rel (0) target = $region29
    $region28: #{tpu_custom_call.1} parent=1 // pred_region
      %712 = dma.done [#allocation4], 32
    $region29: #{tpu_custom_call.1} parent=1 // pred_fallthru
      _
    %713 = vsyncpa [#allocation3], 1
    %714 = vsyncpa [#allocation6], 1
    %715 = vsyncpa [#allocation4], 1

</llo_original>
